<compile_context>
chip_gen: v7x
topology: tpu7x:2x2x1
jax: 0.10.0
libtpu: 0.0.40
codegen_flags: <defaults>
</compile_context>

<pallas_src>
import functools

import jax
import jax.numpy as jnp
from jax import lax
from jax.experimental import pallas as pl
from jax.experimental.pallas import tpu as pltpu

_SHIFTS = tuple(range(-4, 6))    # k_length = 10, matches the PyTorch module
NSHIFT = len(_SHIFTS)
_TAILW = 8                       # carried halo width (>= max |shift| = 5)


def _round_up(x, m):
    return ((x + m - 1) // m) * m


def _talos_kernel(p_ref, l_ref, out_ref, p_tail_ref, l_tail_ref, *,
                  t_valid, tb, use_mxu):
    # p_ref / l_ref: (td, tb) blocks, rows = channels (sublanes), lanes = time.
    t_idx = pl.program_id(1)
    t0 = t_idx * tb                      # global column offset of this time block

    p = p_ref[...].astype(jnp.float32)
    l = l_ref[...].astype(jnp.float32)
    td = p.shape[0]

    if use_mxu:
        ones = jnp.ones((8, td), jnp.float32)

        def colsum(x):                   # channel reduce on the (otherwise idle) MXU
            return jnp.dot(ones, x, preferred_element_type=jnp.float32)[0:1, :]
    else:
        def colsum(x):                   # tiny / odd channel counts: plain sublane reduce
            return jnp.sum(x, axis=0, keepdims=True)

    cp2 = colsum(p * p)                                  # (1, tb)
    cl2 = colsum(l * l)                                  # (1, tb)
    col = lax.broadcasted_iota(jnp.int32, (1, tb), 1)    # local lane index

    # Per shift: SSE_k = sum(p^2) + sum(l_shift^2) - 2 * sum(p * l_shift).
    # Zero padding beyond T (and beyond D) makes most bounds automatic; the only lane masks
    # needed are (a) roll-wrap lanes of the cross term (fixed up cross-block via scratch) and
    # (b) the global label-column bounds of the l^2 term.
    rows = []
    for k in _SHIFTS:
        if k == 0:
            cross = colsum(p * l)
            l2_row = cl2
        else:
            rolled = pltpu.roll(l, shift=(-k) % tb, axis=1)    # rolled[:, i] = l[:, (i+k) % tb]
            cross = colsum(p * rolled)
            if k > 0:
                cross = jnp.where(col < (tb - k), cross, 0.0)          # drop wrapped lanes
                l2_row = jnp.where(col >= (k - t0), cl2, 0.0)          # labels[0:k] unused
            else:
                cross = jnp.where(col >= (-k), cross, 0.0)             # drop wrapped lanes
                l2_row = jnp.where(col < (t_valid + k - t0), cl2, 0.0)  # labels[T+k:T] unused
        rows.append(cp2 + l2_row - 2.0 * cross)

    stacked = jnp.concatenate(rows, axis=0)              # (NSHIFT, tb)
    totals = jnp.sum(stacked, axis=1, keepdims=True)     # (NSHIFT, 1): single lane reduce

    @pl.when(t_idx == 0)
    def _():
        out_ref[...] = jnp.zeros_like(out_ref)

    out_ref[...] += totals.reshape(1, NSHIFT, 1)

    @pl.when(t_idx > 0)
    def _():
        # Cross-block fixups: roll-wrapped lanes pair the previous block's tail with this
        # block's head (pure cross terms; zero-padded columns contribute nothing).
        fixes = []
        for k in _SHIFTS:
            if k == 0:
                fixes.append(jnp.zeros((1, 1), jnp.float32))
            elif k > 0:
                a = p_tail_ref[:, _TAILW - k:]       # prev preds, last k cols   (td, k)
                b = l[:, 0:k]                        # cur labels, first k cols  (td, k)
                s = jnp.sum(jnp.sum(a * b, axis=0, keepdims=True), axis=1, keepdims=True)
                fixes.append(-2.0 * s)
            else:
                a = p[:, 0:(-k)]                     # cur preds, first |k| cols (td, |k|)
                b = l_tail_ref[:, _TAILW + k:]       # prev labels, last |k| cols
                s = jnp.sum(jnp.sum(a * b, axis=0, keepdims=True), axis=1, keepdims=True)
                fixes.append(-2.0 * s)
        corr = jnp.concatenate(fixes, axis=0)        # (NSHIFT, 1)
        out_ref[...] += corr.reshape(1, NSHIFT, 1)

    # Carry this block's tails for the next time step.
    p_tail_ref[...] = p[:, tb - _TAILW:]
    l_tail_ref[...] = l[:, tb - _TAILW:]


@functools.partial(jax.jit, static_argnames=("time_block", "max_block_rows"))
def talos_loss(preds, labels, time_block=2048, max_block_rows=128):
    T, D = preds.shape
    assert labels.shape == (T, D)
    assert time_block % 128 == 0 and max_block_rows % 8 == 0

    if preds.dtype not in (jnp.float32, jnp.bfloat16):
        preds = preds.astype(jnp.float32)
    labels = labels.astype(preds.dtype)

    # Time goes on the TPU lane axis.  For D == 1 the transpose is a free reshape.
    if D == 1:
        p = preds.reshape(1, T)
        l = labels.reshape(1, T)
    else:
        p = preds.T
        l = labels.T

    # Time tiling: tb lanes per block, zero-pad T up to a multiple of tb.
    tb = min(time_block, _round_up(T, 128))
    nt = -(-T // tb)
    t_pad = nt * tb
    if t_pad != T:
        p = jnp.pad(p, ((0, 0), (0, t_pad - T)))
        l = jnp.pad(l, ((0, 0), (0, t_pad - T)))

    # Channel tiling: >= 2 row tiles once D >= 16 (v7x second core), rows padded with zeros.
    if D < 16:
        td, d_pad = D, D
    else:
        td = min(max_block_rows, _round_up(-(-D // 2), 8))
        d_pad = _round_up(D, td)
        if d_pad != D:
            p = jnp.pad(p, ((0, d_pad - D), (0, 0)))
            l = jnp.pad(l, ((0, d_pad - D), (0, 0)))
    nd = d_pad // td

    kernel = functools.partial(_talos_kernel, t_valid=T, tb=tb,
                               use_mxu=(td % 8 == 0))

    partials = pl.pallas_call(
        kernel,
        out_shape=jax.ShapeDtypeStruct((nd, NSHIFT, 1), jnp.float32),
        grid_spec=pltpu.PrefetchScalarGridSpec(
            num_scalar_prefetch=0,
            grid=(nd, nt),
            in_specs=[
                pl.BlockSpec((td, tb), lambda d, t: (d, t)),
                pl.BlockSpec((td, tb), lambda d, t: (d, t)),
            ],
            out_specs=pl.BlockSpec((1, NSHIFT, 1), lambda d, t: (d, 0, 0)),
            scratch_shapes=[
                pltpu.VMEM((td, _TAILW), jnp.float32),   # previous block's pred tail
                pltpu.VMEM((td, _TAILW), jnp.float32),   # previous block's label tail
            ],
        ),
        compiler_params=pltpu.CompilerParams(
            dimension_semantics=("parallel", "arbitrary"),
        ),
    )(p, l)

    # Tiny epilogue: combine row-tile partials, min over shifts, scale once (min is
    # invariant under the positive 1/(T*D) scale).
    totals = jnp.sum(partials[:, :, 0], axis=0)          # (NSHIFT,)
    return jnp.min(totals) / float(T * D)


def talos_ref(preds, labels):
    """Pure-JAX reference mirroring the PyTorch forward."""
    T, D = labels.shape
    losses = []
    for k in _SHIFTS:
        if k > 0:
            sh = jnp.concatenate([labels[k:], jnp.zeros((k, D), labels.dtype)], axis=0)
        elif k == 0:
            sh = labels
        else:
            sh = jnp.concatenate([jnp.zeros((-k, D), labels.dtype), labels[: T + k]], axis=0)
        losses.append(jnp.mean((preds - sh) ** 2))
    return jnp.min(jnp.stack(losses))


if __name__ == "__main__":
    key = jax.random.PRNGKey(0)
    ks = jax.random.split(key, 8)

    # 1) Small rPPG-style clip: single time block, tiny channel count (sublane-reduce path).
    p1 = jax.random.normal(ks[0], (64, 4), dtype=jnp.float32)
    l1 = jax.random.normal(ks[1], (64, 4), dtype=jnp.float32)
    o1 = jax.block_until_ready(talos_loss(p1, l1))
    r1 = jax.block_until_ready(talos_ref(p1, l1))
    if not jnp.allclose(o1, r1, rtol=1e-4, atol=1e-5):
        raise AssertionError(f"case1 mismatch: kernel={o1} ref={r1}")

    # 2) D == 1 signal, ragged T, 3 time blocks (exercises carried-halo cross-block fixups).
    p2 = jax.random.normal(ks[2], (300, 1), dtype=jnp.float32)
    l2 = jax.random.normal(ks[3], (300, 1), dtype=jnp.float32)
    o2 = jax.block_until_ready(talos_loss(p2, l2, time_block=128))
    r2 = jax.block_until_ready(talos_ref(p2, l2))
    if not jnp.allclose(o2, r2, rtol=1e-4, atol=1e-5):
        raise AssertionError(f"case2 mismatch: kernel={o2} ref={r2}")

    # 3) Wide channel axis: row tiling + MXU column sums, single time block.
    p3 = jax.random.normal(ks[4], (128, 40), dtype=jnp.float32)
    l3 = jax.random.normal(ks[5], (128, 40), dtype=jnp.float32)
    o3 = jax.block_until_ready(talos_loss(p3, l3, max_block_rows=16))
    r3 = jax.block_until_ready(talos_ref(p3, l3))
    if not jnp.allclose(o3, r3, rtol=1e-4, atol=1e-5):
        raise AssertionError(f"case3 mismatch: kernel={o3} ref={r3}")

    # 4) Everything at once: row tiling, 2 time blocks, ragged T, cross-block fixups.
    p4 = jax.random.normal(ks[6], (200, 40), dtype=jnp.float32)
    l4 = jax.random.normal(ks[7], (200, 40), dtype=jnp.float32)
    o4 = jax.block_until_ready(talos_loss(p4, l4, time_block=128, max_block_rows=16))
    r4 = jax.block_until_ready(talos_ref(p4, l4))
    if not jnp.allclose(o4, r4, rtol=1e-4, atol=1e-5):
        raise AssertionError(f"case4 mismatch: kernel={o4} ref={r4}")

    print("KERNEL_OK")
</pallas_src>

<mosaic_0001>
module attributes {stable_mosaic.version = 11 : i64} {
  func.func @_talos_kernel(%arg0: i32, %arg1: i32, %arg2: memref<4x128xf32, #tpu.memory_space<vmem>>, %arg3: memref<4x128xf32, #tpu.memory_space<vmem>>, %arg4: memref<1x10x1xf32, #tpu.memory_space<vmem>>, %arg5: memref<4x8xf32, #tpu.memory_space<vmem>>, %arg6: memref<4x8xf32, #tpu.memory_space<vmem>>) attributes {dimension_semantics = [#tpu.dimension_semantics<parallel>, #tpu.dimension_semantics<arbitrary>], iteration_bounds = array<i64: 1, 1>, scalar_prefetch = 0 : i64, scratch_operands = 2 : i64, tpu.core_type = #tpu.core_type<tc>, window_params = [{transform_indices = @transform_0, window_bounds = array<i64: 4, 128>}, {transform_indices = @transform_1, window_bounds = array<i64: 4, 128>}, {transform_indices = @transform_2, window_bounds = array<i64: 1, 10, 1>}]} {
    %c128_i32 = arith.constant 128 : i32
    %0 = arith.muli %arg1, %c128_i32 : i32
    %c0 = arith.constant 0 : index
    %c0_0 = arith.constant 0 : index
    %1 = vector.load %arg2[%c0, %c0_0] : memref<4x128xf32, #tpu.memory_space<vmem>>, vector<4x128xf32>
    %c0_1 = arith.constant 0 : index
    %c0_2 = arith.constant 0 : index
    %2 = vector.load %arg3[%c0_1, %c0_2] : memref<4x128xf32, #tpu.memory_space<vmem>>, vector<4x128xf32>
    %3 = arith.mulf %1, %1 : vector<4x128xf32>
    %cst = arith.constant dense<0.000000e+00> : vector<128xf32>
    %4 = vector.multi_reduction <add>, %3, %cst [0] : vector<4x128xf32> to vector<128xf32>
    %5 = vector.shape_cast %4 : vector<128xf32> to vector<1x128xf32>
    %6 = arith.mulf %2, %2 : vector<4x128xf32>
    %cst_3 = arith.constant dense<0.000000e+00> : vector<128xf32>
    %7 = vector.multi_reduction <add>, %6, %cst_3 [0] : vector<4x128xf32> to vector<128xf32>
    %8 = vector.shape_cast %7 : vector<128xf32> to vector<1x128xf32>
    %9 = tpu.iota {dimensions = array<i32: 1>} : vector<1x128xi32>
    %c4_i32 = arith.constant 4 : i32
    %10 = tpu.dynamic_rotate %2 by %c4_i32 dim 1 : vector<4x128xf32>, i32 -> vector<4x128xf32>
    %11 = arith.mulf %1, %10 : vector<4x128xf32>
    %cst_4 = arith.constant dense<0.000000e+00> : vector<128xf32>
    %12 = vector.multi_reduction <add>, %11, %cst_4 [0] : vector<4x128xf32> to vector<128xf32>
    %13 = vector.shape_cast %12 : vector<128xf32> to vector<1x128xf32>
    %c4_i32_5 = arith.constant 4 : i32
    %14 = vector.broadcast %c4_i32_5 : i32 to vector<1x128xi32>
    %15 = arith.cmpi sge, %9, %14 : vector<1x128xi32>
    %cst_6 = arith.constant 0.000000e+00 : f32
    %16 = vector.broadcast %cst_6 : f32 to vector<1x128xf32>
    %17 = arith.select %15, %13, %16 : vector<1x128xi1>, vector<1x128xf32>
    %c60_i32 = arith.constant 60 : i32
    %18 = arith.subi %c60_i32, %0 : i32
    %19 = vector.broadcast %18 : i32 to vector<1x128xi32>
    %20 = arith.cmpi slt, %9, %19 : vector<1x128xi32>
    %cst_7 = arith.constant 0.000000e+00 : f32
    %21 = vector.broadcast %cst_7 : f32 to vector<1x128xf32>
    %22 = arith.select %20, %8, %21 : vector<1x128xi1>, vector<1x128xf32>
    %23 = arith.addf %5, %22 : vector<1x128xf32>
    %cst_8 = arith.constant 2.000000e+00 : f32
    %24 = vector.broadcast %cst_8 : f32 to vector<1x128xf32>
    %25 = arith.mulf %24, %17 : vector<1x128xf32>
    %26 = arith.subf %23, %25 : vector<1x128xf32>
    %c3_i32 = arith.constant 3 : i32
    %27 = tpu.dynamic_rotate %2 by %c3_i32 dim 1 : vector<4x128xf32>, i32 -> vector<4x128xf32>
    %28 = arith.mulf %1, %27 : vector<4x128xf32>
    %cst_9 = arith.constant dense<0.000000e+00> : vector<128xf32>
    %29 = vector.multi_reduction <add>, %28, %cst_9 [0] : vector<4x128xf32> to vector<128xf32>
    %30 = vector.shape_cast %29 : vector<128xf32> to vector<1x128xf32>
    %c3_i32_10 = arith.constant 3 : i32
    %31 = vector.broadcast %c3_i32_10 : i32 to vector<1x128xi32>
    %32 = arith.cmpi sge, %9, %31 : vector<1x128xi32>
    %cst_11 = arith.constant 0.000000e+00 : f32
    %33 = vector.broadcast %cst_11 : f32 to vector<1x128xf32>
    %34 = arith.select %32, %30, %33 : vector<1x128xi1>, vector<1x128xf32>
    %c61_i32 = arith.constant 61 : i32
    %35 = arith.subi %c61_i32, %0 : i32
    %36 = vector.broadcast %35 : i32 to vector<1x128xi32>
    %37 = arith.cmpi slt, %9, %36 : vector<1x128xi32>
    %cst_12 = arith.constant 0.000000e+00 : f32
    %38 = vector.broadcast %cst_12 : f32 to vector<1x128xf32>
    %39 = arith.select %37, %8, %38 : vector<1x128xi1>, vector<1x128xf32>
    %40 = arith.addf %5, %39 : vector<1x128xf32>
    %cst_13 = arith.constant 2.000000e+00 : f32
    %41 = vector.broadcast %cst_13 : f32 to vector<1x128xf32>
    %42 = arith.mulf %41, %34 : vector<1x128xf32>
    %43 = arith.subf %40, %42 : vector<1x128xf32>
    %c2_i32 = arith.constant 2 : i32
    %44 = tpu.dynamic_rotate %2 by %c2_i32 dim 1 : vector<4x128xf32>, i32 -> vector<4x128xf32>
    %45 = arith.mulf %1, %44 : vector<4x128xf32>
    %cst_14 = arith.constant dense<0.000000e+00> : vector<128xf32>
    %46 = vector.multi_reduction <add>, %45, %cst_14 [0] : vector<4x128xf32> to vector<128xf32>
    %47 = vector.shape_cast %46 : vector<128xf32> to vector<1x128xf32>
    %c2_i32_15 = arith.constant 2 : i32
    %48 = vector.broadcast %c2_i32_15 : i32 to vector<1x128xi32>
    %49 = arith.cmpi sge, %9, %48 : vector<1x128xi32>
    %cst_16 = arith.constant 0.000000e+00 : f32
    %50 = vector.broadcast %cst_16 : f32 to vector<1x128xf32>
    %51 = arith.select %49, %47, %50 : vector<1x128xi1>, vector<1x128xf32>
    %c62_i32 = arith.constant 62 : i32
    %52 = arith.subi %c62_i32, %0 : i32
    %53 = vector.broadcast %52 : i32 to vector<1x128xi32>
    %54 = arith.cmpi slt, %9, %53 : vector<1x128xi32>
    %cst_17 = arith.constant 0.000000e+00 : f32
    %55 = vector.broadcast %cst_17 : f32 to vector<1x128xf32>
    %56 = arith.select %54, %8, %55 : vector<1x128xi1>, vector<1x128xf32>
    %57 = arith.addf %5, %56 : vector<1x128xf32>
    %cst_18 = arith.constant 2.000000e+00 : f32
    %58 = vector.broadcast %cst_18 : f32 to vector<1x128xf32>
    %59 = arith.mulf %58, %51 : vector<1x128xf32>
    %60 = arith.subf %57, %59 : vector<1x128xf32>
    %c1_i32 = arith.constant 1 : i32
    %61 = tpu.dynamic_rotate %2 by %c1_i32 dim 1 : vector<4x128xf32>, i32 -> vector<4x128xf32>
    %62 = arith.mulf %1, %61 : vector<4x128xf32>
    %cst_19 = arith.constant dense<0.000000e+00> : vector<128xf32>
    %63 = vector.multi_reduction <add>, %62, %cst_19 [0] : vector<4x128xf32> to vector<128xf32>
    %64 = vector.shape_cast %63 : vector<128xf32> to vector<1x128xf32>
    %c1_i32_20 = arith.constant 1 : i32
    %65 = vector.broadcast %c1_i32_20 : i32 to vector<1x128xi32>
    %66 = arith.cmpi sge, %9, %65 : vector<1x128xi32>
    %cst_21 = arith.constant 0.000000e+00 : f32
    %67 = vector.broadcast %cst_21 : f32 to vector<1x128xf32>
    %68 = arith.select %66, %64, %67 : vector<1x128xi1>, vector<1x128xf32>
    %c63_i32 = arith.constant 63 : i32
    %69 = arith.subi %c63_i32, %0 : i32
    %70 = vector.broadcast %69 : i32 to vector<1x128xi32>
    %71 = arith.cmpi slt, %9, %70 : vector<1x128xi32>
    %cst_22 = arith.constant 0.000000e+00 : f32
    %72 = vector.broadcast %cst_22 : f32 to vector<1x128xf32>
    %73 = arith.select %71, %8, %72 : vector<1x128xi1>, vector<1x128xf32>
    %74 = arith.addf %5, %73 : vector<1x128xf32>
    %cst_23 = arith.constant 2.000000e+00 : f32
    %75 = vector.broadcast %cst_23 : f32 to vector<1x128xf32>
    %76 = arith.mulf %75, %68 : vector<1x128xf32>
    %77 = arith.subf %74, %76 : vector<1x128xf32>
    %78 = arith.mulf %1, %2 : vector<4x128xf32>
    %cst_24 = arith.constant dense<0.000000e+00> : vector<128xf32>
    %79 = vector.multi_reduction <add>, %78, %cst_24 [0] : vector<4x128xf32> to vector<128xf32>
    %80 = vector.shape_cast %79 : vector<128xf32> to vector<1x128xf32>
    %81 = arith.addf %5, %8 : vector<1x128xf32>
    %cst_25 = arith.constant 2.000000e+00 : f32
    %82 = vector.broadcast %cst_25 : f32 to vector<1x128xf32>
    %83 = arith.mulf %82, %80 : vector<1x128xf32>
    %84 = arith.subf %81, %83 : vector<1x128xf32>
    %c127_i32 = arith.constant 127 : i32
    %85 = tpu.dynamic_rotate %2 by %c127_i32 dim 1 : vector<4x128xf32>, i32 -> vector<4x128xf32>
    %86 = arith.mulf %1, %85 : vector<4x128xf32>
    %cst_26 = arith.constant dense<0.000000e+00> : vector<128xf32>
    %87 = vector.multi_reduction <add>, %86, %cst_26 [0] : vector<4x128xf32> to vector<128xf32>
    %88 = vector.shape_cast %87 : vector<128xf32> to vector<1x128xf32>
    %c127_i32_27 = arith.constant 127 : i32
    %89 = vector.broadcast %c127_i32_27 : i32 to vector<1x128xi32>
    %90 = arith.cmpi slt, %9, %89 : vector<1x128xi32>
    %cst_28 = arith.constant 0.000000e+00 : f32
    %91 = vector.broadcast %cst_28 : f32 to vector<1x128xf32>
    %92 = arith.select %90, %88, %91 : vector<1x128xi1>, vector<1x128xf32>
    %c1_i32_29 = arith.constant 1 : i32
    %93 = arith.subi %c1_i32_29, %0 : i32
    %94 = vector.broadcast %93 : i32 to vector<1x128xi32>
    %95 = arith.cmpi sge, %9, %94 : vector<1x128xi32>
    %cst_30 = arith.constant 0.000000e+00 : f32
    %96 = vector.broadcast %cst_30 : f32 to vector<1x128xf32>
    %97 = arith.select %95, %8, %96 : vector<1x128xi1>, vector<1x128xf32>
    %98 = arith.addf %5, %97 : vector<1x128xf32>
    %cst_31 = arith.constant 2.000000e+00 : f32
    %99 = vector.broadcast %cst_31 : f32 to vector<1x128xf32>
    %100 = arith.mulf %99, %92 : vector<1x128xf32>
    %101 = arith.subf %98, %100 : vector<1x128xf32>
    %c126_i32 = arith.constant 126 : i32
    %102 = tpu.dynamic_rotate %2 by %c126_i32 dim 1 : vector<4x128xf32>, i32 -> vector<4x128xf32>
    %103 = arith.mulf %1, %102 : vector<4x128xf32>
    %cst_32 = arith.constant dense<0.000000e+00> : vector<128xf32>
    %104 = vector.multi_reduction <add>, %103, %cst_32 [0] : vector<4x128xf32> to vector<128xf32>
    %105 = vector.shape_cast %104 : vector<128xf32> to vector<1x128xf32>
    %c126_i32_33 = arith.constant 126 : i32
    %106 = vector.broadcast %c126_i32_33 : i32 to vector<1x128xi32>
    %107 = arith.cmpi slt, %9, %106 : vector<1x128xi32>
    %cst_34 = arith.constant 0.000000e+00 : f32
    %108 = vector.broadcast %cst_34 : f32 to vector<1x128xf32>
    %109 = arith.select %107, %105, %108 : vector<1x128xi1>, vector<1x128xf32>
    %c2_i32_35 = arith.constant 2 : i32
    %110 = arith.subi %c2_i32_35, %0 : i32
    %111 = vector.broadcast %110 : i32 to vector<1x128xi32>
    %112 = arith.cmpi sge, %9, %111 : vector<1x128xi32>
    %cst_36 = arith.constant 0.000000e+00 : f32
    %113 = vector.broadcast %cst_36 : f32 to vector<1x128xf32>
    %114 = arith.select %112, %8, %113 : vector<1x128xi1>, vector<1x128xf32>
    %115 = arith.addf %5, %114 : vector<1x128xf32>
    %cst_37 = arith.constant 2.000000e+00 : f32
    %116 = vector.broadcast %cst_37 : f32 to vector<1x128xf32>
    %117 = arith.mulf %116, %109 : vector<1x128xf32>
    %118 = arith.subf %115, %117 : vector<1x128xf32>
    %c125_i32 = arith.constant 125 : i32
    %119 = tpu.dynamic_rotate %2 by %c125_i32 dim 1 : vector<4x128xf32>, i32 -> vector<4x128xf32>
    %120 = arith.mulf %1, %119 : vector<4x128xf32>
    %cst_38 = arith.constant dense<0.000000e+00> : vector<128xf32>
    %121 = vector.multi_reduction <add>, %120, %cst_38 [0] : vector<4x128xf32> to vector<128xf32>
    %122 = vector.shape_cast %121 : vector<128xf32> to vector<1x128xf32>
    %c125_i32_39 = arith.constant 125 : i32
    %123 = vector.broadcast %c125_i32_39 : i32 to vector<1x128xi32>
    %124 = arith.cmpi slt, %9, %123 : vector<1x128xi32>
    %cst_40 = arith.constant 0.000000e+00 : f32
    %125 = vector.broadcast %cst_40 : f32 to vector<1x128xf32>
    %126 = arith.select %124, %122, %125 : vector<1x128xi1>, vector<1x128xf32>
    %c3_i32_41 = arith.constant 3 : i32
    %127 = arith.subi %c3_i32_41, %0 : i32
    %128 = vector.broadcast %127 : i32 to vector<1x128xi32>
    %129 = arith.cmpi sge, %9, %128 : vector<1x128xi32>
    %cst_42 = arith.constant 0.000000e+00 : f32
    %130 = vector.broadcast %cst_42 : f32 to vector<1x128xf32>
    %131 = arith.select %129, %8, %130 : vector<1x128xi1>, vector<1x128xf32>
    %132 = arith.addf %5, %131 : vector<1x128xf32>
    %cst_43 = arith.constant 2.000000e+00 : f32
    %133 = vector.broadcast %cst_43 : f32 to vector<1x128xf32>
    %134 = arith.mulf %133, %126 : vector<1x128xf32>
    %135 = arith.subf %132, %134 : vector<1x128xf32>
    %c124_i32 = arith.constant 124 : i32
    %136 = tpu.dynamic_rotate %2 by %c124_i32 dim 1 : vector<4x128xf32>, i32 -> vector<4x128xf32>
    %137 = arith.mulf %1, %136 : vector<4x128xf32>
    %cst_44 = arith.constant dense<0.000000e+00> : vector<128xf32>
    %138 = vector.multi_reduction <add>, %137, %cst_44 [0] : vector<4x128xf32> to vector<128xf32>
    %139 = vector.shape_cast %138 : vector<128xf32> to vector<1x128xf32>
    %c124_i32_45 = arith.constant 124 : i32
    %140 = vector.broadcast %c124_i32_45 : i32 to vector<1x128xi32>
    %141 = arith.cmpi slt, %9, %140 : vector<1x128xi32>
    %cst_46 = arith.constant 0.000000e+00 : f32
    %142 = vector.broadcast %cst_46 : f32 to vector<1x128xf32>
    %143 = arith.select %141, %139, %142 : vector<1x128xi1>, vector<1x128xf32>
    %c4_i32_47 = arith.constant 4 : i32
    %144 = arith.subi %c4_i32_47, %0 : i32
    %145 = vector.broadcast %144 : i32 to vector<1x128xi32>
    %146 = arith.cmpi sge, %9, %145 : vector<1x128xi32>
    %cst_48 = arith.constant 0.000000e+00 : f32
    %147 = vector.broadcast %cst_48 : f32 to vector<1x128xf32>
    %148 = arith.select %146, %8, %147 : vector<1x128xi1>, vector<1x128xf32>
    %149 = arith.addf %5, %148 : vector<1x128xf32>
    %cst_49 = arith.constant 2.000000e+00 : f32
    %150 = vector.broadcast %cst_49 : f32 to vector<1x128xf32>
    %151 = arith.mulf %150, %143 : vector<1x128xf32>
    %152 = arith.subf %149, %151 : vector<1x128xf32>
    %c123_i32 = arith.constant 123 : i32
    %153 = tpu.dynamic_rotate %2 by %c123_i32 dim 1 : vector<4x128xf32>, i32 -> vector<4x128xf32>
    %154 = arith.mulf %1, %153 : vector<4x128xf32>
    %cst_50 = arith.constant dense<0.000000e+00> : vector<128xf32>
    %155 = vector.multi_reduction <add>, %154, %cst_50 [0] : vector<4x128xf32> to vector<128xf32>
    %156 = vector.shape_cast %155 : vector<128xf32> to vector<1x128xf32>
    %c123_i32_51 = arith.constant 123 : i32
    %157 = vector.broadcast %c123_i32_51 : i32 to vector<1x128xi32>
    %158 = arith.cmpi slt, %9, %157 : vector<1x128xi32>
    %cst_52 = arith.constant 0.000000e+00 : f32
    %159 = vector.broadcast %cst_52 : f32 to vector<1x128xf32>
    %160 = arith.select %158, %156, %159 : vector<1x128xi1>, vector<1x128xf32>
    %c5_i32 = arith.constant 5 : i32
    %161 = arith.subi %c5_i32, %0 : i32
    %162 = vector.broadcast %161 : i32 to vector<1x128xi32>
    %163 = arith.cmpi sge, %9, %162 : vector<1x128xi32>
    %cst_53 = arith.constant 0.000000e+00 : f32
    %164 = vector.broadcast %cst_53 : f32 to vector<1x128xf32>
    %165 = arith.select %163, %8, %164 : vector<1x128xi1>, vector<1x128xf32>
    %166 = arith.addf %5, %165 : vector<1x128xf32>
    %cst_54 = arith.constant 2.000000e+00 : f32
    %167 = vector.broadcast %cst_54 : f32 to vector<1x128xf32>
    %168 = arith.mulf %167, %160 : vector<1x128xf32>
    %169 = arith.subf %166, %168 : vector<1x128xf32>
    %170 = tpu.concatenate %26, %43, %60, %77, %84, %101, %118, %135, %152, %169 in 0 : vector<1x128xf32>, vector<1x128xf32>, vector<1x128xf32>, vector<1x128xf32>, vector<1x128xf32>, vector<1x128xf32>, vector<1x128xf32>, vector<1x128xf32>, vector<1x128xf32>, vector<1x128xf32> -> vector<10x128xf32>
    %cst_55 = arith.constant dense<0.000000e+00> : vector<10xf32>
    %171 = vector.multi_reduction <add>, %170, %cst_55 [1] : vector<10x128xf32> to vector<10xf32>
    %172 = vector.shape_cast %171 : vector<10xf32> to vector<10x1xf32>
    %c0_i32 = arith.constant 0 : i32
    %173 = arith.cmpi eq, %arg1, %c0_i32 : i32
    %174 = arith.extui %173 : i1 to i32
    %c0_i32_56 = arith.constant 0 : i32
    %175 = arith.cmpi ne, %174, %c0_i32_56 : i32
    scf.if %175 {
      %cst_69 = arith.constant 0.000000e+00 : f32
      %187 = vector.broadcast %cst_69 : f32 to vector<1x10x1xf32>
      %c0_70 = arith.constant 0 : index
      %c0_71 = arith.constant 0 : index
      %c0_72 = arith.constant 0 : index
      %188 = vector.load %arg4[%c0_70, %c0_71, %c0_72] : memref<1x10x1xf32, #tpu.memory_space<vmem>>, vector<1x10x1xf32>
      tpu.vector_store %arg4[%c0_70, %c0_71, %c0_72], %187 {strides = array<i32>} : memref<1x10x1xf32, #tpu.memory_space<vmem>>, vector<1x10x1xf32>,
    } else {
    }
    %c0_57 = arith.constant 0 : index
    %c0_58 = arith.constant 0 : index
    %c0_59 = arith.constant 0 : index
    %176 = vector.load %arg4[%c0_57, %c0_58, %c0_59] : memref<1x10x1xf32, #tpu.memory_space<vmem>>, vector<1x10x1xf32>
    %177 = vector.shape_cast %172 : vector<10x1xf32> to vector<1x10x1xf32>
    %178 = arith.addf %176, %177 : vector<1x10x1xf32>
    %c0_60 = arith.constant 0 : index
    %c0_61 = arith.constant 0 : index
    %c0_62 = arith.constant 0 : index
    %179 = vector.load %arg4[%c0_60, %c0_61, %c0_62] : memref<1x10x1xf32, #tpu.memory_space<vmem>>, vector<1x10x1xf32>
    tpu.vector_store %arg4[%c0_60, %c0_61, %c0_62], %178 {strides = array<i32>} : memref<1x10x1xf32, #tpu.memory_space<vmem>>, vector<1x10x1xf32>,
    %c0_i32_63 = arith.constant 0 : i32
    %180 = arith.cmpi sgt, %arg1, %c0_i32_63 : i32
    %181 = arith.extui %180 : i1 to i32
    %c0_i32_64 = arith.constant 0 : i32
    %182 = arith.cmpi ne, %181, %c0_i32_64 : i32
    scf.if %182 {
      %187 = vector.extract_strided_slice %1 {offsets = [0, 0], sizes = [4, 4], strides = [1, 1]} : vector<4x128xf32> to vector<4x4xf32>
      %c0_69 = arith.constant 0 : index
      %c4 = arith.constant 4 : index
      %188 = vector.load %arg6[%c0_69, %c4] : memref<4x8xf32, #tpu.memory_space<vmem>>, vector<4x4xf32>
      %189 = arith.mulf %187, %188 : vector<4x4xf32>
      %cst_70 = arith.constant dense<0.000000e+00> : vector<4xf32>
      %190 = vector.multi_reduction <add>, %189, %cst_70 [0] : vector<4x4xf32> to vector<4xf32>
      %191 = vector.shape_cast %190 : vector<4xf32> to vector<1x4xf32>
      %cst_71 = arith.constant dense<0.000000e+00> : vector<1xf32>
      %192 = vector.multi_reduction <add>, %191, %cst_71 [1] : vector<1x4xf32> to vector<1xf32>
      %193 = vector.shape_cast %192 : vector<1xf32> to vector<1x1xf32>
      %cst_72 = arith.constant -2.000000e+00 : f32
      %194 = vector.broadcast %cst_72 : f32 to vector<1x1xf32>
      %195 = arith.mulf %194, %193 : vector<1x1xf32>
      %196 = vector.extract_strided_slice %1 {offsets = [0, 0], sizes = [4, 3], strides = [1, 1]} : vector<4x128xf32> to vector<4x3xf32>
      %c0_73 = arith.constant 0 : index
      %c5 = arith.constant 5 : index
      %197 = vector.load %arg6[%c0_73, %c5] : memref<4x8xf32, #tpu.memory_space<vmem>>, vector<4x3xf32>
      %198 = arith.mulf %196, %197 : vector<4x3xf32>
      %cst_74 = arith.constant dense<0.000000e+00> : vector<3xf32>
      %199 = vector.multi_reduction <add>, %198, %cst_74 [0] : vector<4x3xf32> to vector<3xf32>
      %200 = vector.shape_cast %199 : vector<3xf32> to vector<1x3xf32>
      %cst_75 = arith.constant dense<0.000000e+00> : vector<1xf32>
      %201 = vector.multi_reduction <add>, %200, %cst_75 [1] : vector<1x3xf32> to vector<1xf32>
      %202 = vector.shape_cast %201 : vector<1xf32> to vector<1x1xf32>
      %cst_76 = arith.constant -2.000000e+00 : f32
      %203 = vector.broadcast %cst_76 : f32 to vector<1x1xf32>
      %204 = arith.mulf %203, %202 : vector<1x1xf32>
      %205 = vector.extract_strided_slice %1 {offsets = [0, 0], sizes = [4, 2], strides = [1, 1]} : vector<4x128xf32> to vector<4x2xf32>
      %c0_77 = arith.constant 0 : index
      %c6 = arith.constant 6 : index
      %206 = vector.load %arg6[%c0_77, %c6] : memref<4x8xf32, #tpu.memory_space<vmem>>, vector<4x2xf32>
      %207 = arith.mulf %205, %206 : vector<4x2xf32>
      %cst_78 = arith.constant dense<0.000000e+00> : vector<2xf32>
      %208 = vector.multi_reduction <add>, %207, %cst_78 [0] : vector<4x2xf32> to vector<2xf32>
      %209 = vector.shape_cast %208 : vector<2xf32> to vector<1x2xf32>
      %cst_79 = arith.constant dense<0.000000e+00> : vector<1xf32>
      %210 = vector.multi_reduction <add>, %209, %cst_79 [1] : vector<1x2xf32> to vector<1xf32>
      %211 = vector.shape_cast %210 : vector<1xf32> to vector<1x1xf32>
      %cst_80 = arith.constant -2.000000e+00 : f32
      %212 = vector.broadcast %cst_80 : f32 to vector<1x1xf32>
      %213 = arith.mulf %212, %211 : vector<1x1xf32>
      %214 = vector.extract_strided_slice %1 {offsets = [0, 0], sizes = [4, 1], strides = [1, 1]} : vector<4x128xf32> to vector<4x1xf32>
      %c0_81 = arith.constant 0 : index
      %c7 = arith.constant 7 : index
      %215 = vector.load %arg6[%c0_81, %c7] : memref<4x8xf32, #tpu.memory_space<vmem>>, vector<4x1xf32>
      %216 = arith.mulf %214, %215 : vector<4x1xf32>
      %cst_82 = arith.constant dense<0.000000e+00> : vector<1xf32>
      %217 = vector.multi_reduction <add>, %216, %cst_82 [0] : vector<4x1xf32> to vector<1xf32>
      %218 = vector.shape_cast %217 : vector<1xf32> to vector<1x1xf32>
      %cst_83 = arith.constant dense<0.000000e+00> : vector<1xf32>
      %219 = vector.multi_reduction <add>, %218, %cst_83 [1] : vector<1x1xf32> to vector<1xf32>
      %220 = vector.shape_cast %219 : vector<1xf32> to vector<1x1xf32>
      %cst_84 = arith.constant -2.000000e+00 : f32
      %221 = vector.broadcast %cst_84 : f32 to vector<1x1xf32>
      %222 = arith.mulf %221, %220 : vector<1x1xf32>
      %cst_85 = arith.constant 0.000000e+00 : f32
      %223 = vector.broadcast %cst_85 : f32 to vector<1x1xf32>
      %c0_86 = arith.constant 0 : index
      %c7_87 = arith.constant 7 : index
      %224 = vector.load %arg5[%c0_86, %c7_87] : memref<4x8xf32, #tpu.memory_space<vmem>>, vector<4x1xf32>
      %225 = vector.extract_strided_slice %2 {offsets = [0, 0], sizes = [4, 1], strides = [1, 1]} : vector<4x128xf32> to vector<4x1xf32>
      %226 = arith.mulf %224, %225 : vector<4x1xf32>
      %cst_88 = arith.constant dense<0.000000e+00> : vector<1xf32>
      %227 = vector.multi_reduction <add>, %226, %cst_88 [0] : vector<4x1xf32> to vector<1xf32>
      %228 = vector.shape_cast %227 : vector<1xf32> to vector<1x1xf32>
      %cst_89 = arith.constant dense<0.000000e+00> : vector<1xf32>
      %229 = vector.multi_reduction <add>, %228, %cst_89 [1] : vector<1x1xf32> to vector<1xf32>
      %230 = vector.shape_cast %229 : vector<1xf32> to vector<1x1xf32>
      %cst_90 = arith.constant -2.000000e+00 : f32
      %231 = vector.broadcast %cst_90 : f32 to vector<1x1xf32>
      %232 = arith.mulf %231, %230 : vector<1x1xf32>
      %c0_91 = arith.constant 0 : index
      %c6_92 = arith.constant 6 : index
      %233 = vector.load %arg5[%c0_91, %c6_92] : memref<4x8xf32, #tpu.memory_space<vmem>>, vector<4x2xf32>
      %234 = vector.extract_strided_slice %2 {offsets = [0, 0], sizes = [4, 2], strides = [1, 1]} : vector<4x128xf32> to vector<4x2xf32>
      %235 = arith.mulf %233, %234 : vector<4x2xf32>
      %cst_93 = arith.constant dense<0.000000e+00> : vector<2xf32>
      %236 = vector.multi_reduction <add>, %235, %cst_93 [0] : vector<4x2xf32> to vector<2xf32>
      %237 = vector.shape_cast %236 : vector<2xf32> to vector<1x2xf32>
      %cst_94 = arith.constant dense<0.000000e+00> : vector<1xf32>
      %238 = vector.multi_reduction <add>, %237, %cst_94 [1] : vector<1x2xf32> to vector<1xf32>
      %239 = vector.shape_cast %238 : vector<1xf32> to vector<1x1xf32>
      %cst_95 = arith.constant -2.000000e+00 : f32
      %240 = vector.broadcast %cst_95 : f32 to vector<1x1xf32>
      %241 = arith.mulf %240, %239 : vector<1x1xf32>
      %c0_96 = arith.constant 0 : index
      %c5_97 = arith.constant 5 : index
      %242 = vector.load %arg5[%c0_96, %c5_97] : memref<4x8xf32, #tpu.memory_space<vmem>>, vector<4x3xf32>
      %243 = vector.extract_strided_slice %2 {offsets = [0, 0], sizes = [4, 3], strides = [1, 1]} : vector<4x128xf32> to vector<4x3xf32>
      %244 = arith.mulf %242, %243 : vector<4x3xf32>
      %cst_98 = arith.constant dense<0.000000e+00> : vector<3xf32>
      %245 = vector.multi_reduction <add>, %244, %cst_98 [0] : vector<4x3xf32> to vector<3xf32>
      %246 = vector.shape_cast %245 : vector<3xf32> to vector<1x3xf32>
      %cst_99 = arith.constant dense<0.000000e+00> : vector<1xf32>
      %247 = vector.multi_reduction <add>, %246, %cst_99 [1] : vector<1x3xf32> to vector<1xf32>
      %248 = vector.shape_cast %247 : vector<1xf32> to vector<1x1xf32>
      %cst_100 = arith.constant -2.000000e+00 : f32
      %249 = vector.broadcast %cst_100 : f32 to vector<1x1xf32>
      %250 = arith.mulf %249, %248 : vector<1x1xf32>
      %c0_101 = arith.constant 0 : index
      %c4_102 = arith.constant 4 : index
      %251 = vector.load %arg5[%c0_101, %c4_102] : memref<4x8xf32, #tpu.memory_space<vmem>>, vector<4x4xf32>
      %252 = vector.extract_strided_slice %2 {offsets = [0, 0], sizes = [4, 4], strides = [1, 1]} : vector<4x128xf32> to vector<4x4xf32>
      %253 = arith.mulf %251, %252 : vector<4x4xf32>
      %cst_103 = arith.constant dense<0.000000e+00> : vector<4xf32>
      %254 = vector.multi_reduction <add>, %253, %cst_103 [0] : vector<4x4xf32> to vector<4xf32>
      %255 = vector.shape_cast %254 : vector<4xf32> to vector<1x4xf32>
      %cst_104 = arith.constant dense<0.000000e+00> : vector<1xf32>
      %256 = vector.multi_reduction <add>, %255, %cst_104 [1] : vector<1x4xf32> to vector<1xf32>
      %257 = vector.shape_cast %256 : vector<1xf32> to vector<1x1xf32>
      %cst_105 = arith.constant -2.000000e+00 : f32
      %258 = vector.broadcast %cst_105 : f32 to vector<1x1xf32>
      %259 = arith.mulf %258, %257 : vector<1x1xf32>
      %c0_106 = arith.constant 0 : index
      %c3 = arith.constant 3 : index
      %260 = vector.load %arg5[%c0_106, %c3] : memref<4x8xf32, #tpu.memory_space<vmem>>, vector<4x5xf32>
      %261 = vector.extract_strided_slice %2 {offsets = [0, 0], sizes = [4, 5], strides = [1, 1]} : vector<4x128xf32> to vector<4x5xf32>
      %262 = arith.mulf %260, %261 : vector<4x5xf32>
      %cst_107 = arith.constant dense<0.000000e+00> : vector<5xf32>
      %263 = vector.multi_reduction <add>, %262, %cst_107 [0] : vector<4x5xf32> to vector<5xf32>
      %264 = vector.shape_cast %263 : vector<5xf32> to vector<1x5xf32>
      %cst_108 = arith.constant dense<0.000000e+00> : vector<1xf32>
      %265 = vector.multi_reduction <add>, %264, %cst_108 [1] : vector<1x5xf32> to vector<1xf32>
      %266 = vector.shape_cast %265 : vector<1xf32> to vector<1x1xf32>
      %cst_109 = arith.constant -2.000000e+00 : f32
      %267 = vector.broadcast %cst_109 : f32 to vector<1x1xf32>
      %268 = arith.mulf %267, %266 : vector<1x1xf32>
      %269 = tpu.concatenate %195, %204, %213, %222, %223, %232, %241, %250, %259, %268 in 0 : vector<1x1xf32>, vector<1x1xf32>, vector<1x1xf32>, vector<1x1xf32>, vector<1x1xf32>, vector<1x1xf32>, vector<1x1xf32>, vector<1x1xf32>, vector<1x1xf32>, vector<1x1xf32> -> vector<10x1xf32>
      %c0_110 = arith.constant 0 : index
      %c0_111 = arith.constant 0 : index
      %c0_112 = arith.constant 0 : index
      %270 = vector.load %arg4[%c0_110, %c0_111, %c0_112] : memref<1x10x1xf32, #tpu.memory_space<vmem>>, vector<1x10x1xf32>
      %271 = vector.shape_cast %269 : vector<10x1xf32> to vector<1x10x1xf32>
      %272 = arith.addf %270, %271 : vector<1x10x1xf32>
      %c0_113 = arith.constant 0 : index
      %c0_114 = arith.constant 0 : index
      %c0_115 = arith.constant 0 : index
      %273 = vector.load %arg4[%c0_113, %c0_114, %c0_115] : memref<1x10x1xf32, #tpu.memory_space<vmem>>, vector<1x10x1xf32>
      tpu.vector_store %arg4[%c0_113, %c0_114, %c0_115], %272 {strides = array<i32>} : memref<1x10x1xf32, #tpu.memory_space<vmem>>, vector<1x10x1xf32>,
    } else {
    }
    %183 = vector.extract_strided_slice %1 {offsets = [0, 120], sizes = [4, 8], strides = [1, 1]} : vector<4x128xf32> to vector<4x8xf32>
    %c0_65 = arith.constant 0 : index
    %c0_66 = arith.constant 0 : index
    %184 = vector.load %arg5[%c0_65, %c0_66] : memref<4x8xf32, #tpu.memory_space<vmem>>, vector<4x8xf32>
    tpu.vector_store %arg5[%c0_65, %c0_66], %183 {strides = array<i32>} : memref<4x8xf32, #tpu.memory_space<vmem>>, vector<4x8xf32>,
    %185 = vector.extract_strided_slice %2 {offsets = [0, 120], sizes = [4, 8], strides = [1, 1]} : vector<4x128xf32> to vector<4x8xf32>
    %c0_67 = arith.constant 0 : index
    %c0_68 = arith.constant 0 : index
    %186 = vector.load %arg6[%c0_67, %c0_68] : memref<4x8xf32, #tpu.memory_space<vmem>>, vector<4x8xf32>
    tpu.vector_store %arg6[%c0_67, %c0_68], %185 {strides = array<i32>} : memref<4x8xf32, #tpu.memory_space<vmem>>, vector<4x8xf32>,
    return
  }
  func.func @transform_0(%arg0: i32, %arg1: i32) -> (i32, i32) {
    %c0_i32 = arith.constant 0 : i32
    return %arg0, %arg1 : i32, i32
  }
  func.func @transform_1(%arg0: i32, %arg1: i32) -> (i32, i32) {
    %c0_i32 = arith.constant 0 : i32
    return %arg0, %arg1 : i32, i32
  }
  func.func @transform_2(%arg0: i32, %arg1: i32) -> (i32, i32, i32) {
    %c0_i32 = arith.constant 0 : i32
    %c0_i32_0 = arith.constant 0 : i32
    %c0_i32_1 = arith.constant 0 : i32
    return %arg0, %c0_i32, %c0_i32_0 : i32, i32, i32
  }
}

</mosaic_0001>

<llo_original>
// kernel: talos_loss.1
$region0: #{talos_loss.1}
  #allocation0 [shape = 'u32[]', space=smem, size = 0x4, offset = 0x4, fixed_abs, tag = 'smem constant byte address 0x4 - core index']
  #allocation1 [shape = 'u32[144,128]{1,0:T(1,128)}', space=vmem, size = 0x12000, scoped, tag = 'internal scratch']
  #allocation2 [shape = 'f32[4,8]{1,0:T(4,128)}', space=vmem, size = 0x800, scoped, tag = 'scratch operand']
  #allocation3 [shape = 'f32[4,8]{1,0:T(4,128)}', space=vmem, size = 0x800, scoped, tag = 'scratch operand']
  %s0 = inlined_call_operand.vmem [shape: f32[4,128], index: 0, kind: input, shape index: {}]
  %s1 = inlined_call_operand.vmem [shape: f32[4,128], index: 1, kind: input, shape index: {}]
  %s2 = inlined_call_operand.vmem [shape: f32[1,10,1], index: 2, kind: output, shape index: {}]
  %s3 = sld [smem:[#allocation0]]
  $region26: #{talos_loss.1} parent=0
    _
  %s5 = ssub.s32 1, %s3
  %s6 = scalar_select 0, %s5, %s3
  // Predicated region
  $region2: #{talos_loss.1} parent=0 // pred_check
    _
  $region3: #{talos_loss.1} parent=0 // pred_check_branch
    %8 = sbr.rel (0) target = $region5
  $region4: #{talos_loss.1} parent=0 // pred_region
    _
  $region5: #{talos_loss.1} parent=0 // pred_fallthru
    _
  // Predicated region
  $region6: #{talos_loss.1} parent=0 // pred_check
    _
  $region7: #{talos_loss.1} parent=0 // pred_check_branch
    %10 = sbr.rel (0) target = $region9
  $region8: #{talos_loss.1} parent=0 // pred_region
    _
  $region9: #{talos_loss.1} parent=0 // pred_fallthru
    _
  %s11 = smul.u32 0, 128
  %v12 = vld [vmem:[%s0] sm:$0xf]
  %v13 = vld [vmem:[%s1] sm:$0xf]
  %v14 = vmul.f32 %v12, %v12
  %vm15 = vcmask 1043456
  %v16 = vsel %vm15, %v14, 0.0
  %v17 = vrot.slane %v16, 4
  %v18 = vadd.f32 %v16, %v17
  %v19 = vrot.slane %v18, 2
  %v20 = vadd.f32 %v18, %v19
  %v21 = vrot.slane %v20, 1
  %v22 = vadd.f32 %v20, %v21
  %v23 = vmul.f32 %v13, %v13
  %v24 = vsel %vm15, %v23, 0.0
  %v25 = vrot.slane %v24, 4
  %v26 = vadd.f32 %v24, %v25
  %v27 = vrot.slane %v26, 2
  %v28 = vadd.f32 %v26, %v27
  %v29 = vrot.slane %v28, 1
  %v30 = vadd.f32 %v28, %v29
  %v31 = vlaneseq
  %v32 = vand.u32 %v31, 127
  %33 = vrot.lane.b32.xlu0 %v13, 4
  %v34 = vpop.permute.xlu0 %33
  %v35 = vmul.f32 %v12, %v34
  %v36 = vsel %vm15, %v35, 0.0
  %v37 = vrot.slane %v36, 4
  %v38 = vadd.f32 %v36, %v37
  %v39 = vrot.slane %v38, 2
  %v40 = vadd.f32 %v38, %v39
  %v41 = vrot.slane %v40, 1
  %v42 = vadd.f32 %v40, %v41
  %vm43 = vcmp.ge.s32.totalorder %v32, 4
  %v44 = vsel %vm43, %v42, 0.0
  %s45 = ssub.s32 60, %s11
  %v46 = vstv %s45
  %vm47 = vcmp.lt.s32.totalorder %v32, %v46
  %v48 = vsel %vm47, %v30, 0.0
  %v49 = vadd.f32 %v22, %v48
  %v50 = vmul.f32 %v44, 2.0
  %v51 = vsub.f32 %v49, %v50
  %52 = vrot.lane.b32.xlu0 %v13, 3
  %v53 = vpop.permute.xlu0 %52
  %v54 = vmul.f32 %v12, %v53
  %v55 = vsel %vm15, %v54, 0.0
  %v56 = vrot.slane %v55, 4
  %v57 = vadd.f32 %v55, %v56
  %v58 = vrot.slane %v57, 2
  %v59 = vadd.f32 %v57, %v58
  %v60 = vrot.slane %v59, 1
  %v61 = vadd.f32 %v59, %v60
  %vm62 = vcmp.ge.s32.totalorder %v32, 3
  %v63 = vsel %vm62, %v61, 0.0
  %s64 = ssub.s32 61, %s11
  %v65 = vstv %s64
  %vm66 = vcmp.lt.s32.totalorder %v32, %v65
  %v67 = vsel %vm66, %v30, 0.0
  %v68 = vadd.f32 %v22, %v67
  %v69 = vmul.f32 %v63, 2.0
  %v70 = vsub.f32 %v68, %v69
  %71 = vrot.lane.b32.xlu0 %v13, 2
  %v72 = vpop.permute.xlu0 %71
  %v73 = vmul.f32 %v12, %v72
  %v74 = vsel %vm15, %v73, 0.0
  %v75 = vrot.slane %v74, 4
  %v76 = vadd.f32 %v74, %v75
  %v77 = vrot.slane %v76, 2
  %v78 = vadd.f32 %v76, %v77
  %v79 = vrot.slane %v78, 1
  %v80 = vadd.f32 %v78, %v79
  %vm81 = vcmp.ge.s32.totalorder %v32, 2
  %v82 = vsel %vm81, %v80, 0.0
  %s83 = ssub.s32 62, %s11
  %v84 = vstv %s83
  %vm85 = vcmp.lt.s32.totalorder %v32, %v84
  %v86 = vsel %vm85, %v30, 0.0
  %v87 = vadd.f32 %v22, %v86
  %v88 = vmul.f32 %v82, 2.0
  %v89 = vsub.f32 %v87, %v88
  %90 = vrot.lane.b32.xlu0 %v13, 1
  %v91 = vpop.permute.xlu0 %90
  %v92 = vmul.f32 %v12, %v91
  %v93 = vsel %vm15, %v92, 0.0
  %v94 = vrot.slane %v93, 4
  %v95 = vadd.f32 %v93, %v94
  %v96 = vrot.slane %v95, 2
  %v97 = vadd.f32 %v95, %v96
  %v98 = vrot.slane %v97, 1
  %v99 = vadd.f32 %v97, %v98
  %vm100 = vcmp.ge.s32.totalorder %v32, 1
  %v101 = vsel %vm100, %v99, 0.0
  %s102 = ssub.s32 63, %s11
  %v103 = vstv %s102
  %vm104 = vcmp.lt.s32.totalorder %v32, %v103
  %v105 = vsel %vm104, %v30, 0.0
  %v106 = vadd.f32 %v22, %v105
  %v107 = vmul.f32 %v101, 2.0
  %v108 = vsub.f32 %v106, %v107
  %v109 = vmul.f32 %v12, %v13
  %v110 = vsel %vm15, %v109, 0.0
  %v111 = vrot.slane %v110, 4
  %v112 = vadd.f32 %v110, %v111
  %v113 = vrot.slane %v112, 2
  %v114 = vadd.f32 %v112, %v113
  %v115 = vrot.slane %v114, 1
  %v116 = vadd.f32 %v114, %v115
  %v117 = vadd.f32 %v22, %v30
  %v118 = vmul.f32 %v116, 2.0
  %v119 = vsub.f32 %v117, %v118
  %120 = vrot.lane.b32.xlu0 %v13, 127
  %v121 = vpop.permute.xlu0 %120
  %v122 = vmul.f32 %v12, %v121
  %v123 = vsel %vm15, %v122, 0.0
  %v124 = vrot.slane %v123, 4
  %v125 = vadd.f32 %v123, %v124
  %v126 = vrot.slane %v125, 2
  %v127 = vadd.f32 %v125, %v126
  %v128 = vrot.slane %v127, 1
  %v129 = vadd.f32 %v127, %v128
  %vm130 = vcmp.lt.s32.totalorder %v32, 127
  %v131 = vsel %vm130, %v129, 0.0
  %s132 = ssub.s32 1, %s11
  %v133 = vstv %s132
  %vm134 = vcmp.ge.s32.totalorder %v32, %v133
  %v135 = vsel %vm134, %v30, 0.0
  %v136 = vadd.f32 %v22, %v135
  %v137 = vmul.f32 %v131, 2.0
  %v138 = vsub.f32 %v136, %v137
  %139 = vrot.lane.b32.xlu0 %v13, 126
  %v140 = vpop.permute.xlu0 %139
  %v141 = vmul.f32 %v12, %v140
  %v142 = vsel %vm15, %v141, 0.0
  %v143 = vrot.slane %v142, 4
  %v144 = vadd.f32 %v142, %v143
  %v145 = vrot.slane %v144, 2
  %v146 = vadd.f32 %v144, %v145
  %v147 = vrot.slane %v146, 1
  %v148 = vadd.f32 %v146, %v147
  %vm149 = vcmp.lt.s32.totalorder %v32, 126
  %v150 = vsel %vm149, %v148, 0.0
  %s151 = ssub.s32 2, %s11
  %v152 = vstv %s151
  %vm153 = vcmp.ge.s32.totalorder %v32, %v152
  %v154 = vsel %vm153, %v30, 0.0
  %v155 = vadd.f32 %v22, %v154
  %v156 = vmul.f32 %v150, 2.0
  %v157 = vsub.f32 %v155, %v156
  %158 = vrot.lane.b32.xlu0 %v13, 125
  %v159 = vpop.permute.xlu0 %158
  %v160 = vmul.f32 %v12, %v159
  %v161 = vsel %vm15, %v160, 0.0
  %v162 = vrot.slane %v161, 4
  %v163 = vadd.f32 %v161, %v162
  %v164 = vrot.slane %v163, 2
  %v165 = vadd.f32 %v163, %v164
  %v166 = vrot.slane %v165, 1
  %v167 = vadd.f32 %v165, %v166
  %vm168 = vcmp.lt.s32.totalorder %v32, 125
  %v169 = vsel %vm168, %v167, 0.0
  %s170 = ssub.s32 3, %s11
  %v171 = vstv %s170
  %vm172 = vcmp.ge.s32.totalorder %v32, %v171
  %v173 = vsel %vm172, %v30, 0.0
  %v174 = vadd.f32 %v22, %v173
  %v175 = vmul.f32 %v169, 2.0
  %v176 = vsub.f32 %v174, %v175
  %177 = vrot.lane.b32.xlu0 %v13, 124
  %v178 = vpop.permute.xlu0 %177
  %v179 = vmul.f32 %v12, %v178
  %v180 = vsel %vm15, %v179, 0.0
  %v181 = vrot.slane %v180, 4
  %v182 = vadd.f32 %v180, %v181
  %v183 = vrot.slane %v182, 2
  %v184 = vadd.f32 %v182, %v183
  %v185 = vrot.slane %v184, 1
  %v186 = vadd.f32 %v184, %v185
  %vm187 = vcmp.lt.s32.totalorder %v32, 124
  %v188 = vsel %vm187, %v186, 0.0
  %s189 = ssub.s32 4, %s11
  %v190 = vstv %s189
  %vm191 = vcmp.ge.s32.totalorder %v32, %v190
  %v192 = vsel %vm191, %v30, 0.0
  %v193 = vadd.f32 %v22, %v192
  %v194 = vmul.f32 %v188, 2.0
  %v195 = vsub.f32 %v193, %v194
  %196 = vrot.lane.b32.xlu0 %v13, 123
  %v197 = vpop.permute.xlu0 %196
  %v198 = vmul.f32 %v12, %v197
  %v199 = vsel %vm15, %v198, 0.0
  %v200 = vrot.slane %v199, 4
  %v201 = vadd.f32 %v199, %v200
  %v202 = vrot.slane %v201, 2
  %v203 = vadd.f32 %v201, %v202
  %v204 = vrot.slane %v203, 1
  %v205 = vadd.f32 %v203, %v204
  %vm206 = vcmp.lt.s32.totalorder %v32, 123
  %v207 = vsel %vm206, %v205, 0.0
  %s208 = ssub.s32 5, %s11
  %v209 = vstv %s208
  %vm210 = vcmp.ge.s32.totalorder %v32, %v209
  %v211 = vsel %vm210, %v30, 0.0
  %v212 = vadd.f32 %v22, %v211
  %v213 = vmul.f32 %v207, 2.0
  %v214 = vsub.f32 %v212, %v213
  %vm215 = vcmask 1040384
  %v216 = vsel %vm215, %v51, %v70
  %vm217 = vcmask 1041408
  %v218 = vsel %vm217, %v216, %v89
  %vm219 = vcmask 1042432
  %v220 = vsel %vm219, %v218, %v108
  %v221 = vsel %vm15, %v220, %v119
  %vm222 = vcmask 1044480
  %v223 = vsel %vm222, %v221, %v138
  %vm224 = vcmask 1045504
  %v225 = vsel %vm224, %v223, %v157
  %vm226 = vcmask 1046528
  %v227 = vsel %vm226, %v225, %v176
  %v228 = vsel %vm215, %v195, %v214
  %229 = vadd.xlane.f32.xlu0 %v227
  %v230 = vpop.xlane.xlu0 %229
  %v231 = vsel %vm217, %v228, 0.0
  %232 = vadd.xlane.f32.xlu0 %v231
  %v233 = vpop.xlane.xlu0 %232
  %p234 = scmp.eq.s32.totalorder 0, 0
  // Predicated region
  $region10: #{talos_loss.1} parent=0 // pred_check
    %p235 = pneg %p234
  $region11: #{talos_loss.1} parent=0 // pred_check_branch
    %237 = sbr.rel (%p235) target = $region13
  $region12: #{talos_loss.1} parent=0 // pred_region
    %vm238 = vcmask 7168
    %239 = vst.msk [vmem:[%s2] sm:$0xff] %vm238, 0.0
    %vm240 = vcmask 1024
    %241 = vst.msk [vmem:[%s2 + $0x8] sm:$0x3] %vm240, 0.0
  $region13: #{talos_loss.1} parent=0 // pred_fallthru
    _
  %v242 = vld [vmem:[%s2] sm:$0xff]
  %v243 = vld [vmem:[%s2 + $0x8] sm:$0x3]
  %v244 = vadd.f32 %v242, %v230
  %v245 = vadd.f32 %v243, %v233
  %vm246 = vcmask 7168
  %247 = vst.msk [vmem:[%s2] sm:$0xff] %vm246, %v244
  %vm248 = vcmask 1024
  %249 = vst.msk [vmem:[%s2 + $0x8] sm:$0x3] %vm248, %v245
  %p250 = scmp.gt.s32.totalorder 0, 0
  // Predicated region
  $region14: #{talos_loss.1} parent=0 // pred_check
    %p251 = pneg %p250
  $region15: #{talos_loss.1} parent=0 // pred_check_branch
    %253 = sbr.rel (%p251) target = $region17
  $region16: #{talos_loss.1} parent=0 // pred_region
    %v254 = vld [vmem:[#allocation3] sm:$0xf]
    %256 = vrot.lane.b32.xlu0 %v254, 124
    %v257 = vpop.permute.xlu0 %256
    %v259 = vmul.f32 %v12, %v257
    %vm260 = vcmask 27648
    %v261 = vsel %vm260, %v259, 0.0
    %v262 = vrot.slane %v261, 4
    %v263 = vadd.f32 %v261, %v262
    %v264 = vrot.slane %v263, 2
    %v265 = vadd.f32 %v263, %v264
    %v266 = vrot.slane %v265, 1
    %v267 = vadd.f32 %v265, %v266
    %vm268 = vcmask 31744
    %v269 = vsel %vm268, %v267, 0.0
    %270 = vadd.xlane.f32.xlu0 %v269
    %v271 = vpop.xlane.xlu0 %270
    %v272 = vmul.f32 %v271, -2.0
    %273 = vrot.lane.b32.xlu0 %v254, 123
    %v274 = vpop.permute.xlu0 %273
    %v276 = vmul.f32 %v12, %v274
    %vm277 = vcmask 19456
    %v278 = vsel %vm277, %v276, 0.0
    %v279 = vrot.slane %v278, 4
    %v280 = vadd.f32 %v278, %v279
    %v281 = vrot.slane %v280, 2
    %v282 = vadd.f32 %v280, %v281
    %v283 = vrot.slane %v282, 1
    %v284 = vadd.f32 %v282, %v283
    %vm285 = vcmask 23552
    %v286 = vsel %vm285, %v284, 0.0
    %287 = vadd.xlane.f32.xlu0 %v286
    %v288 = vpop.xlane.xlu0 %287
    %v289 = vmul.f32 %v288, -2.0
    %290 = vrot.lane.b32.xlu0 %v254, 122
    %v291 = vpop.permute.xlu0 %290
    %v293 = vmul.f32 %v12, %v291
    %vm294 = vcmask 11264
    %v295 = vsel %vm294, %v293, 0.0
    %v296 = vrot.slane %v295, 4
    %v297 = vadd.f32 %v295, %v296
    %v298 = vrot.slane %v297, 2
    %v299 = vadd.f32 %v297, %v298
    %v300 = vrot.slane %v299, 1
    %v301 = vadd.f32 %v299, %v300
    %vm302 = vcmask 15360
    %v303 = vsel %vm302, %v301, 0.0
    %304 = vadd.xlane.f32.xlu0 %v303
    %v305 = vpop.xlane.xlu0 %304
    %v306 = vmul.f32 %v305, -2.0
    %307 = vrot.lane.b32.xlu0 %v254, 121
    %v308 = vpop.permute.xlu0 %307
    %v310 = vmul.f32 %v12, %v308
    %vm311 = vcmask 3072
    %v312 = vsel %vm311, %v310, 0.0
    %v313 = vrot.slane %v312, 4
    %v314 = vadd.f32 %v312, %v313
    %v315 = vrot.slane %v314, 2
    %v316 = vadd.f32 %v314, %v315
    %v317 = vrot.slane %v316, 1
    %v318 = vadd.f32 %v316, %v317
    %v319 = vadd.f32 %v318, 0.0
    %v320 = vmul.f32 %v319, -2.0
    %v321 = vld [vmem:[#allocation2] sm:$0xf]
    %323 = vrot.lane.b32.xlu0 %v13, 7
    %v324 = vpop.permute.xlu0 %323
    %v326 = vmul.f32 %v321, %v324
    %vm327 = vcmask 60472
    %v328 = vsel %vm327, %v326, 0.0
    %v329 = vrot.slane %v328, 4
    %v330 = vadd.f32 %v328, %v329
    %v331 = vrot.slane %v330, 2
    %v332 = vadd.f32 %v330, %v331
    %v333 = vrot.slane %v332, 1
    %v334 = vadd.f32 %v332, %v333
    %v335 = vadd.f32 %v334, 0.0
    %v336 = vmul.f32 %v335, -2.0
    %337 = vrot.lane.b32.xlu0 %v13, 6
    %v338 = vpop.permute.xlu0 %337
    %v340 = vmul.f32 %v321, %v338
    %vm341 = vcmask 60464
    %v342 = vsel %vm341, %v340, 0.0
    %v343 = vrot.slane %v342, 4
    %v344 = vadd.f32 %v342, %v343
    %v345 = vrot.slane %v344, 2
    %v346 = vadd.f32 %v344, %v345
    %v347 = vrot.slane %v346, 1
    %v348 = vadd.f32 %v346, %v347
    %350 = vrot.lane.b32.xlu0 %v348, 122
    %v351 = vpop.permute.xlu0 %350
    %v353 = vsel %vm302, %v351, 0.0
    %354 = vadd.xlane.f32.xlu0 %v353
    %v355 = vpop.xlane.xlu0 %354
    %v356 = vmul.f32 %v355, -2.0
    %357 = vrot.lane.b32.xlu0 %v13, 5
    %v358 = vpop.permute.xlu0 %357
    %v360 = vmul.f32 %v321, %v358
    %vm361 = vcmask 60456
    %v362 = vsel %vm361, %v360, 0.0
    %v363 = vrot.slane %v362, 4
    %v364 = vadd.f32 %v362, %v363
    %v365 = vrot.slane %v364, 2
    %v366 = vadd.f32 %v364, %v365
    %v367 = vrot.slane %v366, 1
    %v368 = vadd.f32 %v366, %v367
    %370 = vrot.lane.b32.xlu0 %v368, 123
    %v371 = vpop.permute.xlu0 %370
    %v373 = vsel %vm285, %v371, 0.0
    %374 = vadd.xlane.f32.xlu0 %v373
    %v375 = vpop.xlane.xlu0 %374
    %v376 = vmul.f32 %v375, -2.0
    %377 = vrot.lane.b32.xlu0 %v13, 4
    %v378 = vpop.permute.xlu0 %377
    %v380 = vmul.f32 %v321, %v378
    %vm381 = vcmask 60448
    %v382 = vsel %vm381, %v380, 0.0
    %v383 = vrot.slane %v382, 4
    %v384 = vadd.f32 %v382, %v383
    %v385 = vrot.slane %v384, 2
    %v386 = vadd.f32 %v384, %v385
    %v387 = vrot.slane %v386, 1
    %v388 = vadd.f32 %v386, %v387
    %390 = vrot.lane.b32.xlu0 %v388, 124
    %v391 = vpop.permute.xlu0 %390
    %v393 = vsel %vm268, %v391, 0.0
    %394 = vadd.xlane.f32.xlu0 %v393
    %v395 = vpop.xlane.xlu0 %394
    %v396 = vmul.f32 %v395, -2.0
    %397 = vrot.lane.b32.xlu0 %v13, 3
    %v398 = vpop.permute.xlu0 %397
    %v400 = vmul.f32 %v321, %v398
    %vm401 = vcmask 60440
    %v402 = vsel %vm401, %v400, 0.0
    %v403 = vrot.slane %v402, 4
    %v404 = vadd.f32 %v402, %v403
    %v405 = vrot.slane %v404, 2
    %v406 = vadd.f32 %v404, %v405
    %v407 = vrot.slane %v406, 1
    %v408 = vadd.f32 %v406, %v407
    %410 = vrot.lane.b32.xlu0 %v408, 125
    %v411 = vpop.permute.xlu0 %410
    %vm413 = vcmask 39936
    %v414 = vsel %vm413, %v411, 0.0
    %415 = vadd.xlane.f32.xlu0 %v414
    %v416 = vpop.xlane.xlu0 %415
    %v417 = vmul.f32 %v416, -2.0
    %419 = vrot.lane.b32.xlu0 %v336, 121
    %v420 = vpop.permute.xlu0 %419
    %v422 = vsel %vm215, %v272, %v289
    %v423 = vsel %vm217, %v422, %v306
    %v424 = vsel %vm219, %v423, %v320
    %v425 = vsel %vm15, %v424, 0.0
    %v426 = vsel %vm222, %v425, %v420
    %v427 = vsel %vm224, %v426, %v356
    %v428 = vsel %vm226, %v427, %v376
    %v429 = vsel %vm215, %v396, %v417
    %v430 = vld [vmem:[%s2] sm:$0xff]
    %v431 = vld [vmem:[%s2 + $0x8] sm:$0x3]
    %v432 = vadd.f32 %v430, %v428
    %v433 = vadd.f32 %v431, %v429
    %434 = vst.msk [vmem:[%s2] sm:$0xff] %vm246, %v432
    %435 = vst.msk [vmem:[%s2 + $0x8] sm:$0x3] %vm248, %v433
  $region17: #{talos_loss.1} parent=0 // pred_fallthru
    _
  %437 = vrot.lane.b32.xlu0 %v12, 8
  %v438 = vpop.permute.xlu0 %437
  %vm440 = vcmask 60416
  %441 = vst.msk [vmem:[#allocation2] sm:$0xf] %vm440, %v438
  %443 = vrot.lane.b32.xlu0 %v13, 8
  %v444 = vpop.permute.xlu0 %443
  %446 = vst.msk [vmem:[#allocation3] sm:$0xf] %vm440, %v444
  // Predicated region
  $region18: #{talos_loss.1} parent=0 // pred_check
    _
  $region19: #{talos_loss.1} parent=0 // pred_check_branch
    %448 = sbr.rel (0) target = $region21
  $region20: #{talos_loss.1} parent=0 // pred_region
    _
  $region21: #{talos_loss.1} parent=0 // pred_fallthru
    _
  // Predicated region
  $region22: #{talos_loss.1} parent=0 // pred_check
    _
  $region23: #{talos_loss.1} parent=0 // pred_check_branch
    %450 = sbr.rel (0) target = $region25
  $region24: #{talos_loss.1} parent=0 // pred_region
    _
  $region25: #{talos_loss.1} parent=0 // pred_fallthru
    _

</llo_original>
